<compile_context>
chip_gen: v5e
topology: v5e:2x2
jax: 0.10.0
libtpu: 0.0.40
codegen_flags: <defaults>
</compile_context>

<pallas_src>
import math

import jax
import jax.numpy as jnp
from jax.experimental import pallas as pl
from jax.experimental.pallas import tpu as pltpu


def _bcast_add_kernel(x_ref, p_ref, o_ref):
    # x_ref / o_ref: (N, S, 128); p_ref: (1, S, 128).  Pure VPU broadcast add
    # over the leading batch axis; entirely HBM-bandwidth bound.
    o_ref[...] = (x_ref[...] + p_ref[...]).astype(o_ref.dtype)


def _round_up(v, m):
    return -(-v // m) * m


def image_opt_forward(x, optim, *, target_block_bytes=4 * 1024 * 1024):
    """out = center_crop(pad(x) + optim)  ==  x + center_crop(optim)."""
    N, C, H, W = x.shape
    _, Co, Oh, Ow = optim.shape
    assert Co == C and Oh >= H and Ow >= W, "optim must cover the input"

    # F.pad puts the ceil half of the padding on the left/top; the crop inverts
    # it exactly.  Static Python ints -> a plain aligned XLA slice.
    top = math.ceil((Oh - H) / 2)
    left = math.ceil((Ow - W) / 2)
    optim_crop = optim[:, :, top:top + H, left:left + W].astype(x.dtype)

    # Lane-dense 3-D view (N, R, 128).
    F = C * H * W
    F_128 = _round_up(F, 128)
    if F_128 != F:
        # Rare path (C*H*W not a multiple of 128): one bounded pad/slice pass.
        x3 = jnp.pad(x.reshape(N, F), ((0, 0), (0, F_128 - F)))
        p3 = jnp.pad(optim_crop.reshape(1, F), ((0, 0), (0, F_128 - F)))
        x3 = x3.reshape(N, F_128 // 128, 128)
        p3 = p3.reshape(1, F_128 // 128, 128)
    else:
        x3 = x.reshape(N, F // 128, 128)
        p3 = optim_crop.reshape(1, F // 128, 128)
    R = F_128 // 128

    itemsize = jnp.dtype(x.dtype).itemsize

    # Pick the row-tile S (multiple of 8, or the full extent R).
    if R <= 8:
        S = R                                       # single full-extent block
    else:
        rows_target = max(8, (target_block_bytes // (N * 128 * itemsize)) // 8 * 8)
        n_desired = pl.cdiv(R, rows_target)
        if R >= 32:
            # Megacore (v7x has 2 TCs): at least 4 steps when work allows.
            n_desired = max(n_desired, 4)
        if n_desired > 1 and n_desired % 2:
            n_desired += 1                          # even split across 2 cores
        if n_desired == 1:
            S = R
        else:
            S = max(8, (R // n_desired) // 8 * 8)
    n_steps = pl.cdiv(R, S)

    # Real double-buffered VMEM footprint: x + out blocks (N, S, 128) plus the
    # parameter block (1, S, 128); none of them carries sublane padding.
    block_bytes = (2 * N + 1) * S * 128 * itemsize
    vmem_limit = min(max(2 * block_bytes + (4 << 20), 16 << 20), 48 << 20)

    out3 = pl.pallas_call(
        _bcast_add_kernel,
        out_shape=jax.ShapeDtypeStruct((N, R, 128), x.dtype),
        grid_spec=pltpu.PrefetchScalarGridSpec(
            num_scalar_prefetch=0,
            grid=(n_steps,),
            in_specs=[
                # one lane-dense chunk of every batch row per step
                pl.BlockSpec((N, S, 128), lambda j: (0, j, 0)),
                # matching chunk of the (cropped) parameter, DMA'd exactly once
                pl.BlockSpec((1, S, 128), lambda j: (0, j, 0)),
            ],
            out_specs=pl.BlockSpec((N, S, 128), lambda j: (0, j, 0)),
        ),
        compiler_params=pltpu.CompilerParams(
            dimension_semantics=("parallel",),
            vmem_limit_bytes=vmem_limit,
        ),
    )(x3, p3)

    if F_128 != F:
        return out3.reshape(N, F_128)[:, :F].reshape(N, C, H, W)
    return out3.reshape(N, C, H, W)


def _reference(x, optim):
    """Pure-JAX reference reproducing the PyTorch forward literally."""
    N, C, H, W = x.shape
    Oh, Ow = optim.shape[-2], optim.shape[-1]
    pad_l = math.ceil((Ow - W) / 2)
    pad_r = math.floor((Ow - W) / 2)
    pad_t = math.ceil((Oh - H) / 2)
    pad_b = math.floor((Oh - H) / 2)
    xp = jnp.pad(x, ((0, 0), (0, 0), (pad_t, pad_b), (pad_l, pad_r)))
    xp = xp + optim
    return xp[:, :, pad_t:pad_t + H, pad_l:pad_l + W]


if __name__ == "__main__":
    key = jax.random.PRNGKey(0)
    k1, k2, k3, k4 = jax.random.split(key, 4)

    # Case 1: shapes consistent with the module (batch=2, in_channels=3,
    # spatial=16, optim_size=21 -> odd pad difference exercises ceil/floor).
    x1 = jax.random.normal(k1, (2, 3, 16, 16), dtype=jnp.float32)
    optim1 = 0.001 * jax.random.normal(k2, (1, 3, 21, 21), dtype=jnp.float32)
    out1 = jax.block_until_ready(image_opt_forward(x1, optim1))
    assert out1.shape == x1.shape
    assert jnp.allclose(out1, _reference(x1, optim1), atol=1e-6, rtol=1e-6)

    # Case 2: slightly larger shape to exercise the multi-step "parallel" grid
    # (R = 8*64*64/128 = 256 rows -> 4 even steps for megacore).
    x2 = jax.random.normal(k3, (2, 8, 64, 64), dtype=jnp.float32)
    optim2 = 0.001 * jax.random.normal(k4, (1, 8, 70, 70), dtype=jnp.float32)
    out2 = jax.block_until_ready(image_opt_forward(x2, optim2))
    assert out2.shape == x2.shape
    assert jnp.allclose(out2, _reference(x2, optim2), atol=1e-6, rtol=1e-6)

    print("KERNEL_OK")
</pallas_src>

<mosaic_0001>
module attributes {stable_mosaic.version = 11 : i64} {
  func.func @_bcast_add_kernel(%arg0: i32, %arg1: memref<2x6x128xf32, #tpu.memory_space<vmem>>, %arg2: memref<1x6x128xf32, #tpu.memory_space<vmem>>, %arg3: memref<2x6x128xf32, #tpu.memory_space<vmem>>) attributes {dimension_semantics = [#tpu.dimension_semantics<parallel>], iteration_bounds = array<i64: 1>, scalar_prefetch = 0 : i64, scratch_operands = 0 : i64, tpu.core_type = #tpu.core_type<tc>, window_params = [{transform_indices = @transform_0, window_bounds = array<i64: 2, 6, 128>}, {transform_indices = @transform_1, window_bounds = array<i64: 1, 6, 128>}, {transform_indices = @transform_2, window_bounds = array<i64: 2, 6, 128>}]} {
    %c0 = arith.constant 0 : index
    %c0_0 = arith.constant 0 : index
    %c0_1 = arith.constant 0 : index
    %0 = vector.load %arg1[%c0, %c0_0, %c0_1] : memref<2x6x128xf32, #tpu.memory_space<vmem>>, vector<2x6x128xf32>
    %c0_2 = arith.constant 0 : index
    %c0_3 = arith.constant 0 : index
    %c0_4 = arith.constant 0 : index
    %1 = vector.load %arg2[%c0_2, %c0_3, %c0_4] : memref<1x6x128xf32, #tpu.memory_space<vmem>>, vector<1x6x128xf32>
    %2 = vector.broadcast %1 : vector<1x6x128xf32> to vector<2x6x128xf32>
    %3 = arith.addf %0, %2 : vector<2x6x128xf32>
    %c0_5 = arith.constant 0 : index
    %c0_6 = arith.constant 0 : index
    %c0_7 = arith.constant 0 : index
    %4 = vector.load %arg3[%c0_5, %c0_6, %c0_7] : memref<2x6x128xf32, #tpu.memory_space<vmem>>, vector<2x6x128xf32>
    tpu.vector_store %arg3[%c0_5, %c0_6, %c0_7], %3 {strides = array<i32>} : memref<2x6x128xf32, #tpu.memory_space<vmem>>, vector<2x6x128xf32>,
    return
  }
  func.func @transform_0(%arg0: i32) -> (i32, i32, i32) {
    %c0_i32 = arith.constant 0 : i32
    %c0_i32_0 = arith.constant 0 : i32
    %c0_i32_1 = arith.constant 0 : i32
    return %c0_i32, %arg0, %c0_i32_0 : i32, i32, i32
  }
  func.func @transform_1(%arg0: i32) -> (i32, i32, i32) {
    %c0_i32 = arith.constant 0 : i32
    %c0_i32_0 = arith.constant 0 : i32
    %c0_i32_1 = arith.constant 0 : i32
    return %c0_i32, %arg0, %c0_i32_0 : i32, i32, i32
  }
  func.func @transform_2(%arg0: i32) -> (i32, i32, i32) {
    %c0_i32 = arith.constant 0 : i32
    %c0_i32_0 = arith.constant 0 : i32
    %c0_i32_1 = arith.constant 0 : i32
    return %c0_i32, %arg0, %c0_i32_0 : i32, i32, i32
  }
}

</mosaic_0001>

<llo_original>
// kernel: tpu_custom_call.1
$region0: #{tpu_custom_call.1}
  #allocation0 [shape = 'u32[]', space=smem, size = 0x4, offset = 0x4, fixed_abs, tag = 'smem constant byte address 0x4 - core index']
  #allocation1 [shape = 'u32[72,128]{1,0:T(1,128)}', space=vmem, size = 0x9000, scoped, tag = 'internal scratch']
  %s0 = inlined_call_operand.vmem [shape: f32[2,6,128], index: 0, kind: input, shape index: {}]
  %s1 = inlined_call_operand.vmem [shape: f32[1,6,128], index: 1, kind: input, shape index: {}]
  %s2 = inlined_call_operand.vmem [shape: f32[2,6,128], index: 2, kind: output, shape index: {}]
  %s3 = sld [smem:[#allocation0]]
  $region18: #{tpu_custom_call.1} parent=0
    _
  %s5 = ssub.s32 1, %s3
  %s6 = scalar_select 0, %s5, %s3
  // Predicated region
  $region2: #{tpu_custom_call.1} parent=0 // pred_check
    _
  $region3: #{tpu_custom_call.1} parent=0 // pred_check_branch
    %8 = sbr.rel (0) target = $region5
  $region4: #{tpu_custom_call.1} parent=0 // pred_region
    _
  $region5: #{tpu_custom_call.1} parent=0 // pred_fallthru
    _
  // Predicated region
  $region6: #{tpu_custom_call.1} parent=0 // pred_check
    _
  $region7: #{tpu_custom_call.1} parent=0 // pred_check_branch
    %10 = sbr.rel (0) target = $region9
  $region8: #{tpu_custom_call.1} parent=0 // pred_region
    _
  $region9: #{tpu_custom_call.1} parent=0 // pred_fallthru
    _
  %v11 = vld [vmem:[%s0] sm:$0x3f]
  %v12 = vld [vmem:[%s0 + $0x8] sm:$0x3f]
  %v13 = vld [vmem:[%s1] sm:$0x3f]
  %v14 = vadd.f32 %v11, %v13
  %v15 = vadd.f32 %v12, %v13
  %16 = vst [vmem:[%s2] sm:$0x3f] %v14
  %17 = vst [vmem:[%s2 + $0x8] sm:$0x3f] %v15
  // Predicated region
  $region10: #{tpu_custom_call.1} parent=0 // pred_check
    _
  $region11: #{tpu_custom_call.1} parent=0 // pred_check_branch
    %19 = sbr.rel (0) target = $region13
  $region12: #{tpu_custom_call.1} parent=0 // pred_region
    _
  $region13: #{tpu_custom_call.1} parent=0 // pred_fallthru
    _
  // Predicated region
  $region14: #{tpu_custom_call.1} parent=0 // pred_check
    _
  $region15: #{tpu_custom_call.1} parent=0 // pred_check_branch
    %21 = sbr.rel (0) target = $region17
  $region16: #{tpu_custom_call.1} parent=0 // pred_region
    _
  $region17: #{tpu_custom_call.1} parent=0 // pred_fallthru
    _

</llo_original>
